<compile_context>
chip_gen: v6e
topology: v6e:2x2x1
jax: 0.10.0
libtpu: 0.0.40
codegen_flags: <defaults>
</compile_context>

<pallas_src>
import functools

import jax
import jax.numpy as jnp
from jax.experimental import pallas as pl
from jax.experimental.pallas import tpu as pltpu

LANE = 128


def _round_up(a, b):
    return ((a + b - 1) // b) * b


def _pad2(a, rows, cols, dtype=None):
    out = jnp.pad(a, ((0, rows - a.shape[0]), (0, cols - a.shape[1])))
    return out.astype(dtype) if dtype is not None else out


def _vmem_budget_bytes():
    """Per-generation VMEM ceiling with headroom (v7x: 64 MiB, v5e/v6e: 128 MiB)."""
    try:
        cap = int(pltpu.get_tpu_info().vmem_capacity_bytes)
    except Exception:
        cap = 64 * 1024 * 1024
    return max(32 * 1024 * 1024, cap - 16 * 1024 * 1024)


def _masked_log_softmax(z, nclass):
    # mask zero-padded class lanes before the softmax reduction
    col = jax.lax.broadcasted_iota(jnp.int32, z.shape, 1)
    z = jnp.where(col < nclass, z, -1e30)
    m = jnp.max(z, axis=1, keepdims=True)
    zs = z - m
    return zs - jnp.log(jnp.sum(jnp.exp(zs), axis=1, keepdims=True))


# ---------------- fused small-graph kernel (adj resident in VMEM) -----------
def fused_gcn_kernel(x_ref, adj_ref, w1_ref, b1_ref, w2_ref, b2_ref,
                     logp_ref, h_ref, *, nclass):
    adj = adj_ref[...]
    s1 = jnp.dot(x_ref[...], w1_ref[...], preferred_element_type=jnp.float32)
    h = jnp.maximum(
        jnp.dot(adj, s1.astype(jnp.bfloat16), preferred_element_type=jnp.float32)
        + b1_ref[...],
        0.0,
    )
    # TODO(synk): F.dropout(training=True) is stochastic; reproduced here in
    # eval mode (identity). Could be added with pltpu.prng_seed/prng_random_bits.
    h_ref[...] = h
    s2 = jnp.dot(h.astype(jnp.bfloat16), w2_ref[...],
                 preferred_element_type=jnp.float32)
    z = jnp.dot(adj, s2.astype(jnp.bfloat16),
                preferred_element_type=jnp.float32) + b2_ref[...]
    logp_ref[...] = _masked_log_softmax(z, nclass)


# ---------------- streaming pass 0: s1 = x @ W1 (row-tiled) -----------------
def xw_kernel(x_ref, w_ref, s_ref):
    s_ref[...] = jnp.dot(
        x_ref[...], w_ref[...], preferred_element_type=jnp.float32
    ).astype(s_ref.dtype)


# ---------------- streaming pass 1: h = relu(adj@s1 + b1), s2 = h@W2 --------
def spmm_relu_kernel(adj_ref, s1_ref, b1_ref, w2_ref, h_ref, s2_ref, acc_ref,
                     *, s1_resident, tk):
    k = pl.program_id(1)

    @pl.when(k == 0)
    def _():
        acc_ref[...] = jnp.zeros_like(acc_ref)

    if s1_resident:
        off = pl.multiple_of(k * tk, tk)
        s1_blk = s1_ref[pl.ds(off, tk), :]
    else:
        s1_blk = s1_ref[...]

    acc_ref[...] += jnp.dot(adj_ref[...], s1_blk,
                            preferred_element_type=jnp.float32)

    @pl.when(k == pl.num_programs(1) - 1)
    def _():
        h = jnp.maximum(acc_ref[...] + b1_ref[...], 0.0)
        # TODO(synk): dropout(training=True) reproduced as identity (eval mode).
        h_ref[...] = h
        # Fused layer-2 feature transform (purely row-wise, so legal per tile).
        s2_ref[...] = jnp.dot(
            h.astype(w2_ref.dtype), w2_ref[...],
            preferred_element_type=jnp.float32,
        ).astype(s2_ref.dtype)


# ---------------- streaming pass 2: logp = log_softmax(adj@s2 + b2) ---------
def spmm_logsoftmax_kernel(adj_ref, s2_ref, b2_ref, logp_ref, acc_ref,
                           *, nclass, s2_resident, tk):
    k = pl.program_id(1)

    @pl.when(k == 0)
    def _():
        acc_ref[...] = jnp.zeros_like(acc_ref)

    if s2_resident:
        off = pl.multiple_of(k * tk, tk)
        s2_blk = s2_ref[pl.ds(off, tk), :]
    else:
        s2_blk = s2_ref[...]

    acc_ref[...] += jnp.dot(adj_ref[...], s2_blk,
                            preferred_element_type=jnp.float32)

    @pl.when(k == pl.num_programs(1) - 1)
    def _():
        logp_ref[...] = _masked_log_softmax(acc_ref[...] + b2_ref[...], nclass)


def gcn_forward(x, adj, w1, b1, w2, b2, *, force_streaming=False):
    n, nfeat = x.shape
    nhid = w1.shape[1]
    nclass = w2.shape[1]
    b1 = jnp.reshape(b1, (1, -1))
    b2 = jnp.reshape(b2, (1, -1))

    f_pad = _round_up(nfeat, LANE)
    h_pad = _round_up(nhid, LANE)
    c_pad = _round_up(nclass, LANE)

    budget = _vmem_budget_bytes()

    # ---- small-graph fast path: adj + features fully VMEM-resident ----------
    n_small = _round_up(n, LANE)
    fused_bytes = (
        2 * n_small * n_small                        # adj (bf16)
        + 2 * n_small * f_pad                        # x (bf16)
        + 2 * (f_pad * h_pad + h_pad * c_pad)        # W1 / W2 (bf16)
        + 4 * n_small * (3 * h_pad + 3 * c_pad)      # intermediates + outputs (f32)
    )
    if not force_streaming and fused_bytes <= int(0.8 * budget):
        x_p = _pad2(x, n_small, f_pad, jnp.bfloat16)
        adj_p = _pad2(adj, n_small, n_small, jnp.bfloat16)
        w1_p = _pad2(w1, f_pad, h_pad, jnp.bfloat16)
        b1_p = _pad2(b1, 1, h_pad)
        w2_p = _pad2(w2, h_pad, c_pad, jnp.bfloat16)
        b2_p = _pad2(b2, 1, c_pad)

        logp_full, h_full = pl.pallas_call(
            functools.partial(fused_gcn_kernel, nclass=nclass),
            out_shape=(
                jax.ShapeDtypeStruct((n_small, c_pad), jnp.float32),
                jax.ShapeDtypeStruct((n_small, h_pad), jnp.float32),
            ),
            compiler_params=pltpu.CompilerParams(
                vmem_limit_bytes=int(min(budget, fused_bytes + (8 << 20))),
            ),
        )(x_p, adj_p, w1_p, b1_p, w2_p, b2_p)
        return logp_full[:n, :nclass], h_full[:n, :nhid]

    # ---- streaming path ------------------------------------------------------
    tm = 512                               # row tile (>=2 tiles -> both v7x cores)
    tk = 1024                              # adj reduction tile (1-2 MiB DMAs)
    n_pad = _round_up(n, max(tm, tk))
    grid_rows = n_pad // tm
    grid_red = n_pad // tk

    # Can the per-node feature streams (s1/s2) live fully in VMEM?
    base_tiles = (2 * tm * tk * 2                    # adj tile (2x buffered)
                  + 2 * tm * h_pad * 4               # h output
                  + 2 * tm * c_pad * 4               # s2 / logp output
                  + tm * h_pad * 4                   # accumulator
                  + 2 * h_pad * c_pad * 2            # resident W2
                  + 2 * (h_pad + c_pad) * 4)         # biases
    s1_res_bytes = 2 * n_pad * h_pad * 2
    s2_res_bytes = 2 * n_pad * c_pad * 2
    feat_resident = (base_tiles + max(s1_res_bytes, s2_res_bytes)
                     + (8 << 20)) <= budget

    x_p = _pad2(x, n_pad, f_pad, jnp.bfloat16)       # bf16: halve pass-0 reads
    adj_p = _pad2(adj, n_pad, n_pad, jnp.bfloat16)   # bf16: halve dominant stream
    w1_p = _pad2(w1, f_pad, h_pad, jnp.bfloat16)
    b1_p = _pad2(b1, 1, h_pad)
    w2_p = _pad2(w2, h_pad, c_pad, jnp.bfloat16)
    b2_p = _pad2(b2, 1, c_pad)

    def _limit(buffer_bytes):
        return int(min(budget, buffer_bytes + (8 << 20)))

    # ---- pass 0: s1 = x @ W1 (row-tiled dense matmul, bf16 out) -------------
    s1 = pl.pallas_call(
        xw_kernel,
        out_shape=jax.ShapeDtypeStruct((n_pad, h_pad), jnp.bfloat16),
        grid=(grid_rows,),
        in_specs=[
            pl.BlockSpec((tm, f_pad), lambda i: (i, 0)),
            pl.BlockSpec((f_pad, h_pad), lambda i: (0, 0)),
        ],
        out_specs=pl.BlockSpec((tm, h_pad), lambda i: (i, 0)),
        compiler_params=pltpu.CompilerParams(
            dimension_semantics=("parallel",),
            vmem_limit_bytes=_limit(
                2 * tm * f_pad * 2 + 2 * f_pad * h_pad * 2 + 2 * tm * h_pad * 2),
        ),
        cost_estimate=pl.CostEstimate(
            flops=2 * n_pad * f_pad * h_pad,
            transcendentals=0,
            bytes_accessed=2 * n_pad * f_pad + 2 * f_pad * h_pad + 2 * n_pad * h_pad,
        ),
    )(x_p, w1_p)

    if feat_resident:
        s1_spec = pl.BlockSpec((n_pad, h_pad), lambda i, k: (0, 0))
        s2_spec = pl.BlockSpec((n_pad, c_pad), lambda i, k: (0, 0))
        s1_hbm = n_pad * h_pad * 2
        s2_hbm = n_pad * c_pad * 2
    else:
        s1_spec = pl.BlockSpec((tk, h_pad), lambda i, k: (k, 0))
        s2_spec = pl.BlockSpec((tk, c_pad), lambda i, k: (k, 0))
        s1_hbm = grid_rows * n_pad * h_pad * 2        # re-streamed per row tile
        s2_hbm = grid_rows * n_pad * c_pad * 2

    # ---- pass 1: h = relu(adj @ s1 + b1), s2 = h @ W2 -----------------------
    h_full, s2 = pl.pallas_call(
        functools.partial(spmm_relu_kernel, s1_resident=feat_resident, tk=tk),
        out_shape=(
            jax.ShapeDtypeStruct((n_pad, h_pad), jnp.float32),     # x2 (f32)
            jax.ShapeDtypeStruct((n_pad, c_pad), jnp.bfloat16),    # h @ W2
        ),
        grid=(grid_rows, grid_red),
        in_specs=[
            pl.BlockSpec((tm, tk), lambda i, k: (i, k)),           # adj tile
            s1_spec,                                               # s1 (resident/streamed)
            pl.BlockSpec((1, h_pad), lambda i, k: (0, 0)),         # b1
            pl.BlockSpec((h_pad, c_pad), lambda i, k: (0, 0)),     # W2 (resident)
        ],
        out_specs=(
            pl.BlockSpec((tm, h_pad), lambda i, k: (i, 0)),
            pl.BlockSpec((tm, c_pad), lambda i, k: (i, 0)),
        ),
        scratch_shapes=[pltpu.VMEM((tm, h_pad), jnp.float32)],
        compiler_params=pltpu.CompilerParams(
            dimension_semantics=("parallel", "arbitrary"),
            vmem_limit_bytes=_limit(
                base_tiles + (s1_res_bytes if feat_resident else 2 * tk * h_pad * 2)),
        ),
        cost_estimate=pl.CostEstimate(
            flops=2 * n_pad * n_pad * h_pad + 2 * n_pad * h_pad * c_pad,
            transcendentals=0,
            bytes_accessed=2 * n_pad * n_pad + s1_hbm
            + 4 * n_pad * h_pad + 2 * n_pad * c_pad,
        ),
    )(adj_p, s1, b1_p, w2_p)

    # ---- pass 2: logp = log_softmax(adj @ s2 + b2) --------------------------
    logp_full = pl.pallas_call(
        functools.partial(spmm_logsoftmax_kernel, nclass=nclass,
                          s2_resident=feat_resident, tk=tk),
        out_shape=jax.ShapeDtypeStruct((n_pad, c_pad), jnp.float32),
        grid=(grid_rows, grid_red),
        in_specs=[
            pl.BlockSpec((tm, tk), lambda i, k: (i, k)),           # adj tile
            s2_spec,                                               # s2 (resident/streamed)
            pl.BlockSpec((1, c_pad), lambda i, k: (0, 0)),         # b2
        ],
        out_specs=pl.BlockSpec((tm, c_pad), lambda i, k: (i, 0)),
        scratch_shapes=[pltpu.VMEM((tm, c_pad), jnp.float32)],
        compiler_params=pltpu.CompilerParams(
            dimension_semantics=("parallel", "arbitrary"),
            vmem_limit_bytes=_limit(
                2 * tm * tk * 2
                + (s2_res_bytes if feat_resident else 2 * tk * c_pad * 2)
                + 2 * c_pad * 4 + 2 * tm * c_pad * 4 + tm * c_pad * 4),
        ),
        cost_estimate=pl.CostEstimate(
            flops=2 * n_pad * n_pad * c_pad,
            transcendentals=n_pad * c_pad,
            bytes_accessed=2 * n_pad * n_pad + s2_hbm + 4 * n_pad * c_pad,
        ),
    )(adj_p, s2, b2_p)

    # slice away the row/lane padding
    return logp_full[:n, :nclass], h_full[:n, :nhid]


if __name__ == "__main__":
    # Small shapes consistent with the module: N nodes, nfeat -> nhid -> nclass
    N, nfeat, nhid, nclass = 16, 8, 32, 4

    key = jax.random.PRNGKey(0)
    kx, kadj, kw1, kb1, kw2, kb2 = jax.random.split(key, 6)

    x = jax.random.normal(kx, (N, nfeat), dtype=jnp.float32)

    # symmetric, row-normalized dense adjacency with self loops
    a = jax.random.uniform(kadj, (N, N), dtype=jnp.float32)
    a = (a + a.T) * 0.5 + jnp.eye(N, dtype=jnp.float32)
    adj = a / jnp.sum(a, axis=1, keepdims=True)

    # deterministic parameter init (Glorot-like scale), shapes from GraphConv
    w1 = jax.random.normal(kw1, (nfeat, nhid), dtype=jnp.float32) / jnp.sqrt(nfeat)
    b1 = jax.random.normal(kb1, (1, nhid), dtype=jnp.float32) * 0.01
    w2 = jax.random.normal(kw2, (nhid, nclass), dtype=jnp.float32) / jnp.sqrt(nhid)
    b2 = jax.random.normal(kb2, (1, nclass), dtype=jnp.float32) * 0.01

    fwd = jax.jit(gcn_forward, static_argnames=("force_streaming",))

    # fast path (fused, adj resident in VMEM) and streaming path
    logp, x2 = fwd(x, adj, w1, b1, w2, b2)
    logp_s, x2_s = fwd(x, adj, w1, b1, w2, b2, force_streaming=True)
    jax.block_until_ready((logp, x2, logp_s, x2_s))

    # pure-JAX f32 reference (kernel uses bf16 adj/features -> loose tolerance)
    h_ref = jnp.maximum(adj @ (x @ w1) + b1, 0.0)
    z_ref = adj @ (h_ref @ w2) + b2
    logp_ref = jax.nn.log_softmax(z_ref, axis=1)

    for lp, h in ((logp, x2), (logp_s, x2_s)):
        assert lp.shape == (N, nclass)
        assert h.shape == (N, nhid)
        row_sums = jnp.sum(jnp.exp(lp), axis=1)
        assert bool(jnp.all(jnp.abs(row_sums - 1.0) < 1e-3))
        assert bool(jnp.max(jnp.abs(h - h_ref)) < 1e-1)
        assert bool(jnp.max(jnp.abs(lp - logp_ref)) < 1.5e-1)

    print("KERNEL_OK")
</pallas_src>

<mosaic_0001>
module attributes {stable_mosaic.version = 11 : i64} {
  func.func @fused_gcn_kernel(%arg0: memref<128x128xbf16, #tpu.memory_space<vmem>>, %arg1: memref<128x128xbf16, #tpu.memory_space<vmem>>, %arg2: memref<128x128xbf16, #tpu.memory_space<vmem>>, %arg3: memref<1x128xf32, #tpu.memory_space<vmem>>, %arg4: memref<128x128xbf16, #tpu.memory_space<vmem>>, %arg5: memref<1x128xf32, #tpu.memory_space<vmem>>, %arg6: memref<128x128xf32, #tpu.memory_space<vmem>>, %arg7: memref<128x128xf32, #tpu.memory_space<vmem>>) attributes {dimension_semantics = [], scalar_prefetch = 0 : i64, scratch_operands = 0 : i64, tpu.core_type = #tpu.core_type<tc>} {
    %c0 = arith.constant 0 : index
    %c0_0 = arith.constant 0 : index
    %0 = vector.load %arg1[%c0, %c0_0] : memref<128x128xbf16, #tpu.memory_space<vmem>>, vector<128x128xbf16>
    %c0_1 = arith.constant 0 : index
    %c0_2 = arith.constant 0 : index
    %1 = vector.load %arg0[%c0_1, %c0_2] : memref<128x128xbf16, #tpu.memory_space<vmem>>, vector<128x128xbf16>
    %c0_3 = arith.constant 0 : index
    %c0_4 = arith.constant 0 : index
    %2 = vector.load %arg2[%c0_3, %c0_4] : memref<128x128xbf16, #tpu.memory_space<vmem>>, vector<128x128xbf16>
    %cst = arith.constant dense<0.000000e+00> : vector<128x128xf32>
    %3 = tpu.matmul %1, %2, %cst {dimension_numbers = #tpu.dot_dimension_numbers<[1], [0], [0], [1], [0, 0, 1, 1], [], []>} : vector<128x128xbf16>, vector<128x128xbf16>, vector<128x128xf32> -> vector<128x128xf32>
    %4 = arith.truncf %3 : vector<128x128xf32> to vector<128x128xbf16>
    %cst_5 = arith.constant dense<0.000000e+00> : vector<128x128xf32>
    %5 = tpu.matmul %0, %4, %cst_5 {dimension_numbers = #tpu.dot_dimension_numbers<[1], [0], [0], [1], [0, 0, 1, 1], [], []>} : vector<128x128xbf16>, vector<128x128xbf16>, vector<128x128xf32> -> vector<128x128xf32>
    %c0_6 = arith.constant 0 : index
    %c0_7 = arith.constant 0 : index
    %6 = vector.load %arg3[%c0_6, %c0_7] : memref<1x128xf32, #tpu.memory_space<vmem>>, vector<1x128xf32>
    %7 = vector.broadcast %6 : vector<1x128xf32> to vector<128x128xf32>
    %8 = arith.addf %5, %7 : vector<128x128xf32>
    %cst_8 = arith.constant 0.000000e+00 : f32
    %9 = vector.broadcast %cst_8 : f32 to vector<128x128xf32>
    %10 = arith.maximumf %8, %9 : vector<128x128xf32>
    %c0_9 = arith.constant 0 : index
    %c0_10 = arith.constant 0 : index
    %11 = vector.load %arg7[%c0_9, %c0_10] : memref<128x128xf32, #tpu.memory_space<vmem>>, vector<128x128xf32>
    tpu.vector_store %arg7[%c0_9, %c0_10], %10 {strides = array<i32>} : memref<128x128xf32, #tpu.memory_space<vmem>>, vector<128x128xf32>,
    %12 = arith.truncf %10 : vector<128x128xf32> to vector<128x128xbf16>
    %c0_11 = arith.constant 0 : index
    %c0_12 = arith.constant 0 : index
    %13 = vector.load %arg4[%c0_11, %c0_12] : memref<128x128xbf16, #tpu.memory_space<vmem>>, vector<128x128xbf16>
    %cst_13 = arith.constant dense<0.000000e+00> : vector<128x128xf32>
    %14 = tpu.matmul %12, %13, %cst_13 {dimension_numbers = #tpu.dot_dimension_numbers<[1], [0], [0], [1], [0, 0, 1, 1], [], []>} : vector<128x128xbf16>, vector<128x128xbf16>, vector<128x128xf32> -> vector<128x128xf32>
    %15 = arith.truncf %14 : vector<128x128xf32> to vector<128x128xbf16>
    %cst_14 = arith.constant dense<0.000000e+00> : vector<128x128xf32>
    %16 = tpu.matmul %0, %15, %cst_14 {dimension_numbers = #tpu.dot_dimension_numbers<[1], [0], [0], [1], [0, 0, 1, 1], [], []>} : vector<128x128xbf16>, vector<128x128xbf16>, vector<128x128xf32> -> vector<128x128xf32>
    %c0_15 = arith.constant 0 : index
    %c0_16 = arith.constant 0 : index
    %17 = vector.load %arg5[%c0_15, %c0_16] : memref<1x128xf32, #tpu.memory_space<vmem>>, vector<1x128xf32>
    %18 = vector.broadcast %17 : vector<1x128xf32> to vector<128x128xf32>
    %19 = arith.addf %16, %18 : vector<128x128xf32>
    %20 = tpu.iota {dimensions = array<i32: 1>} : vector<128x128xi32>
    %c4_i32 = arith.constant 4 : i32
    %21 = vector.broadcast %c4_i32 : i32 to vector<128x128xi32>
    %22 = arith.cmpi slt, %20, %21 : vector<128x128xi32>
    %cst_17 = arith.constant -1.000000e+30 : f32
    %23 = vector.broadcast %cst_17 : f32 to vector<128x128xf32>
    %24 = arith.select %22, %19, %23 : vector<128x128xi1>, vector<128x128xf32>
    %cst_18 = arith.constant dense<0xFF800000> : vector<128xf32>
    %25 = vector.multi_reduction <maximumf>, %24, %cst_18 [1] : vector<128x128xf32> to vector<128xf32>
    %26 = vector.shape_cast %25 : vector<128xf32> to vector<128x1xf32>
    %27 = vector.broadcast %26 : vector<128x1xf32> to vector<128x128xf32>
    %28 = arith.subf %24, %27 : vector<128x128xf32>
    %29 = math.exp %28 : vector<128x128xf32>
    %cst_19 = arith.constant dense<0.000000e+00> : vector<128xf32>
    %30 = vector.multi_reduction <add>, %29, %cst_19 [1] : vector<128x128xf32> to vector<128xf32>
    %31 = vector.shape_cast %30 : vector<128xf32> to vector<128x1xf32>
    %32 = math.log %31 : vector<128x1xf32>
    %33 = vector.broadcast %32 : vector<128x1xf32> to vector<128x128xf32>
    %34 = arith.subf %28, %33 : vector<128x128xf32>
    %c0_20 = arith.constant 0 : index
    %c0_21 = arith.constant 0 : index
    %35 = vector.load %arg6[%c0_20, %c0_21] : memref<128x128xf32, #tpu.memory_space<vmem>>, vector<128x128xf32>
    tpu.vector_store %arg6[%c0_20, %c0_21], %34 {strides = array<i32>} : memref<128x128xf32, #tpu.memory_space<vmem>>, vector<128x128xf32>,
    return
  }
}

</mosaic_0001>

<llo_original>
// kernel: gcn_forward.1
$region0: #{gcn_forward.1}
  #allocation0 [shape = 'u32[]', space=smem, size = 0x4, offset = 0x4, fixed_abs, tag = 'smem constant byte address 0x4 - core index']
  #allocation1 [shape = 'u32[144,128]{1,0:T(1,128)}', space=vmem, size = 0x12000, scoped, tag = 'internal scratch']
  %s0 = inlined_call_operand.vmem [shape: bf16[128,128], index: 0, kind: input, shape index: {}]
  %s1 = inlined_call_operand.vmem [shape: bf16[128,128], index: 1, kind: input, shape index: {}]
  %s2 = inlined_call_operand.vmem [shape: bf16[128,128], index: 2, kind: input, shape index: {}]
  %s3 = inlined_call_operand.vmem [shape: f32[1,128], index: 3, kind: input, shape index: {}]
  %s4 = inlined_call_operand.vmem [shape: bf16[128,128], index: 4, kind: input, shape index: {}]
  %s5 = inlined_call_operand.vmem [shape: f32[1,128], index: 5, kind: input, shape index: {}]
  %s6 = inlined_call_operand.vmem [shape: f32[128,128], index: 6, kind: output, shape index: {0}]
  %s7 = inlined_call_operand.vmem [shape: f32[128,128], index: 7, kind: output, shape index: {1}]
  %8 = xla_tuple %s6, %s7
  %s9 = sld [smem:[#allocation0]]
  $region42: #{gcn_forward.1} parent=0
    _
  %s11 = ssub.s32 1, %s9
  %s12 = scalar_select 0, %s11, %s9
  // Predicated region
  $region2: #{gcn_forward.1} parent=0 // pred_check
    _
  $region3: #{gcn_forward.1} parent=0 // pred_check_branch
    %14 = sbr.rel (0) target = $region5
  $region4: #{gcn_forward.1} parent=0 // pred_region
    _
  $region5: #{gcn_forward.1} parent=0 // pred_fallthru
    _
  // Predicated region
  $region6: #{gcn_forward.1} parent=0 // pred_check
    _
  $region7: #{gcn_forward.1} parent=0 // pred_check_branch
    %16 = sbr.rel (0) target = $region9
  $region8: #{gcn_forward.1} parent=0 // pred_region
    _
  $region9: #{gcn_forward.1} parent=0 // pred_fallthru
    _
  // Predicated region
  $region10: #{gcn_forward.1} parent=0 // pred_check
    _
  $region11: #{gcn_forward.1} parent=0 // pred_check_branch
    %18 = sbr.rel (0) target = $region13
  $region12: #{gcn_forward.1} parent=0 // pred_region
    _
  $region13: #{gcn_forward.1} parent=0 // pred_fallthru
    _
  // Predicated region
  $region14: #{gcn_forward.1} parent=0 // pred_check
    _
  $region15: #{gcn_forward.1} parent=0 // pred_check_branch
    %20 = sbr.rel (0) target = $region17
  $region16: #{gcn_forward.1} parent=0 // pred_region
    _
  $region17: #{gcn_forward.1} parent=0 // pred_fallthru
    _
  // Predicated region
  $region18: #{gcn_forward.1} parent=0 // pred_check
    _
  $region19: #{gcn_forward.1} parent=0 // pred_check_branch
    %22 = sbr.rel (0) target = $region21
  $region20: #{gcn_forward.1} parent=0 // pred_region
    _
  $region21: #{gcn_forward.1} parent=0 // pred_fallthru
    _
  // Predicated region
  $region22: #{gcn_forward.1} parent=0 // pred_check
    _
  $region23: #{gcn_forward.1} parent=0 // pred_check_branch
    %24 = sbr.rel (0) target = $region25
  $region24: #{gcn_forward.1} parent=0 // pred_region
    _
  $region25: #{gcn_forward.1} parent=0 // pred_fallthru
    _
  %v26 = vld [vmem:[%s1] sm:$0xf]
  %v27 = vld [vmem:[%s1 + $0x4] sm:$0xf]
  %v28 = vld [vmem:[%s1 + $0x8] sm:$0xf]
  %v29 = vld [vmem:[%s1 + $0xc] sm:$0xf]
  %v30 = vld [vmem:[%s1 + $0x10] sm:$0xf]
  %v31 = vld [vmem:[%s1 + $0x14] sm:$0xf]
  %v32 = vld [vmem:[%s1 + $0x18] sm:$0xf]
  %v33 = vld [vmem:[%s1 + $0x1c] sm:$0xf]
  %v34 = vld [vmem:[%s1 + $0x20] sm:$0xf]
  %v35 = vld [vmem:[%s1 + $0x24] sm:$0xf]
  %v36 = vld [vmem:[%s1 + $0x28] sm:$0xf]
  %v37 = vld [vmem:[%s1 + $0x2c] sm:$0xf]
  %v38 = vld [vmem:[%s1 + $0x30] sm:$0xf]
  %v39 = vld [vmem:[%s1 + $0x34] sm:$0xf]
  %v40 = vld [vmem:[%s1 + $0x38] sm:$0xf]
  %v41 = vld [vmem:[%s1 + $0x3c] sm:$0xf]
  %v42 = vld [vmem:[%s0] sm:$0xf]
  %v43 = vld [vmem:[%s0 + $0x4] sm:$0xf]
  %v44 = vld [vmem:[%s0 + $0x8] sm:$0xf]
  %v45 = vld [vmem:[%s0 + $0xc] sm:$0xf]
  %v46 = vld [vmem:[%s0 + $0x10] sm:$0xf]
  %v47 = vld [vmem:[%s0 + $0x14] sm:$0xf]
  %v48 = vld [vmem:[%s0 + $0x18] sm:$0xf]
  %v49 = vld [vmem:[%s0 + $0x1c] sm:$0xf]
  %v50 = vld [vmem:[%s0 + $0x20] sm:$0xf]
  %v51 = vld [vmem:[%s0 + $0x24] sm:$0xf]
  %v52 = vld [vmem:[%s0 + $0x28] sm:$0xf]
  %v53 = vld [vmem:[%s0 + $0x2c] sm:$0xf]
  %v54 = vld [vmem:[%s0 + $0x30] sm:$0xf]
  %v55 = vld [vmem:[%s0 + $0x34] sm:$0xf]
  %v56 = vld [vmem:[%s0 + $0x38] sm:$0xf]
  %v57 = vld [vmem:[%s0 + $0x3c] sm:$0xf]
  %v58 = vld [vmem:[%s2] sm:$0xf]
  %v59 = vld [vmem:[%s2 + $0x4] sm:$0xf]
  %v60 = vld [vmem:[%s2 + $0x8] sm:$0xf]
  %v61 = vld [vmem:[%s2 + $0xc] sm:$0xf]
  %v62 = vld [vmem:[%s2 + $0x10] sm:$0xf]
  %v63 = vld [vmem:[%s2 + $0x14] sm:$0xf]
  %v64 = vld [vmem:[%s2 + $0x18] sm:$0xf]
  %v65 = vld [vmem:[%s2 + $0x1c] sm:$0xf]
  %v66 = vld [vmem:[%s2 + $0x20] sm:$0xf]
  %v67 = vld [vmem:[%s2 + $0x24] sm:$0xf]
  %v68 = vld [vmem:[%s2 + $0x28] sm:$0xf]
  %v69 = vld [vmem:[%s2 + $0x2c] sm:$0xf]
  %v70 = vld [vmem:[%s2 + $0x30] sm:$0xf]
  %v71 = vld [vmem:[%s2 + $0x34] sm:$0xf]
  %v72 = vld [vmem:[%s2 + $0x38] sm:$0xf]
  %v73 = vld [vmem:[%s2 + $0x3c] sm:$0xf]
  %v90 = vunpack.c.l.b16 %v42
  %v91 = vunpack.c.l.b16 %v43
  %v92 = vunpack.c.l.b16 %v44
  %v93 = vunpack.c.l.b16 %v45
  %v94 = vunpack.c.l.b16 %v46
  %v95 = vunpack.c.l.b16 %v47
  %v96 = vunpack.c.l.b16 %v48
  %v97 = vunpack.c.l.b16 %v49
  %v98 = vunpack.c.l.b16 %v50
  %v99 = vunpack.c.l.b16 %v51
  %v100 = vunpack.c.l.b16 %v52
  %v101 = vunpack.c.l.b16 %v53
  %v102 = vunpack.c.l.b16 %v54
  %v103 = vunpack.c.l.b16 %v55
  %v104 = vunpack.c.l.b16 %v56
  %v105 = vunpack.c.l.b16 %v57
  %v106 = vpack.c.b16 %v91, %v90
  %v107 = vpack.c.b16 %v93, %v92
  %v108 = vpack.c.b16 %v95, %v94
  %v109 = vpack.c.b16 %v97, %v96
  %v110 = vpack.c.b16 %v99, %v98
  %v111 = vpack.c.b16 %v101, %v100
  %v112 = vpack.c.b16 %v103, %v102
  %v113 = vpack.c.b16 %v105, %v104
  %v138 = vunpack.c.l.b16 %v58
  %v139 = vunpack.c.l.b16 %v59
  %v140 = vunpack.c.l.b16 %v60
  %v141 = vunpack.c.l.b16 %v61
  %v142 = vunpack.c.l.b16 %v62
  %v143 = vunpack.c.l.b16 %v63
  %v144 = vunpack.c.l.b16 %v64
  %v145 = vunpack.c.l.b16 %v65
  %v146 = vunpack.c.l.b16 %v66
  %v147 = vunpack.c.l.b16 %v67
  %v148 = vunpack.c.l.b16 %v68
  %v149 = vunpack.c.l.b16 %v69
  %v150 = vunpack.c.l.b16 %v70
  %v151 = vunpack.c.l.b16 %v71
  %v152 = vunpack.c.l.b16 %v72
  %v153 = vunpack.c.l.b16 %v73
  %v154 = vpack.c.b16 %v139, %v138
  %v155 = vpack.c.b16 %v141, %v140
  %v156 = vpack.c.b16 %v143, %v142
  %v157 = vpack.c.b16 %v145, %v144
  %v158 = vpack.c.b16 %v147, %v146
  %v159 = vpack.c.b16 %v149, %v148
  %v160 = vpack.c.b16 %v151, %v150
  %v161 = vpack.c.b16 %v153, %v152
  %170 = vmatprep.subr.bf16.mxu0 0
  %171 = vmatpush1.bf16.msra.mxu0 %v161
  %172 = vmatprep.subr.bf16.mxu0 0
  %173 = vmatpush1.bf16.msra.mxu0 %v160
  %174 = vmatprep.subr.bf16.mxu0 0
  %175 = vmatpush1.bf16.msra.mxu0 %v159
  %176 = vmatprep.subr.bf16.mxu0 0
  %177 = vmatpush1.bf16.msra.mxu0 %v158
  %178 = vmatprep.subr.bf16.mxu0 0
  %179 = vmatpush1.bf16.msra.mxu0 %v157
  %180 = vmatprep.subr.bf16.mxu0 0
  %181 = vmatpush1.bf16.msra.mxu0 %v156
  %182 = vmatprep.subr.bf16.mxu0 0
  %183 = vmatpush1.bf16.msra.mxu0 %v155
  %184 = vmatprep.subr.bf16.mxu0 0
  %185 = vmatpush1.bf16.msra.mxu0 %v154
  %186 = vmatprep.subr.bf16.mxu0 0
  %187 = vmatpush2.bf16.msra.mxu0 0
  %188 = vmatprep.subr.bf16.mxu0 0
  %189 = vmatpush2.bf16.msra.mxu0 0
  %190 = vmatprep.subr.bf16.mxu0 0
  %191 = vmatpush2.bf16.msra.mxu0 0
  %192 = vmatprep.subr.bf16.mxu0 0
  %193 = vmatpush2.bf16.msra.mxu0 0
  %194 = vmatprep.subr.bf16.mxu0 0
  %195 = vmatpush2.bf16.msra.mxu0 0
  %196 = vmatprep.subr.bf16.mxu0 0
  %197 = vmatpush2.bf16.msra.mxu0 0
  %198 = vmatprep.subr.bf16.mxu0 0
  %199 = vmatpush2.bf16.msra.mxu0 0
  %200 = vmatprep.subr.bf16.mxu0 0
  %201 = vmatpush2.bf16.msra.mxu0 0
  %202 = vmatprep.mubr.bf16.mxu0 0
  %203 = vmatmul.mubr.bf16.gmra.mxu0 %v106
  %v204 = vpop.f32.mrf.mxu0
  %v205 = vadd.f32 0.0, %v204
  %v206 = vpop.f32.mrf.mxu0
  %v207 = vpop.f32.mrf.mxu0
  %v208 = vadd.f32 0.0, %v207
  %v209 = vpop.f32.mrf.mxu0
  %210 = vmatprep.mubr.bf16.mxu0 0
  %211 = vmatmul.mubr.bf16.gmra.mxu0 %v107
  %v212 = vpop.f32.mrf.mxu0
  %v213 = vadd.f32 0.0, %v212
  %v214 = vpop.f32.mrf.mxu0
  %v215 = vpop.f32.mrf.mxu0
  %v216 = vadd.f32 0.0, %v215
  %v217 = vpop.f32.mrf.mxu0
  %218 = vmatprep.mubr.bf16.mxu0 0
  %219 = vmatmul.mubr.bf16.gmra.mxu0 %v108
  %v220 = vpop.f32.mrf.mxu0
  %v221 = vadd.f32 0.0, %v220
  %v222 = vpop.f32.mrf.mxu0
  %v223 = vpop.f32.mrf.mxu0
  %v224 = vadd.f32 0.0, %v223
  %v225 = vpop.f32.mrf.mxu0
  %226 = vmatprep.mubr.bf16.mxu0 0
  %227 = vmatmul.mubr.bf16.gmra.mxu0 %v109
  %v228 = vpop.f32.mrf.mxu0
  %v229 = vadd.f32 0.0, %v228
  %v230 = vpop.f32.mrf.mxu0
  %v231 = vpop.f32.mrf.mxu0
  %v232 = vadd.f32 0.0, %v231
  %v233 = vpop.f32.mrf.mxu0
  %234 = vmatprep.mubr.bf16.mxu0 0
  %235 = vmatmul.mubr.bf16.gmra.mxu0 %v110
  %v236 = vpop.f32.mrf.mxu0
  %v237 = vadd.f32 0.0, %v236
  %v238 = vpop.f32.mrf.mxu0
  %v239 = vpop.f32.mrf.mxu0
  %v240 = vadd.f32 0.0, %v239
  %v241 = vpop.f32.mrf.mxu0
  %242 = vmatprep.mubr.bf16.mxu0 0
  %243 = vmatmul.mubr.bf16.gmra.mxu0 %v111
  %v244 = vpop.f32.mrf.mxu0
  %v245 = vadd.f32 0.0, %v244
  %v246 = vpop.f32.mrf.mxu0
  %v247 = vpop.f32.mrf.mxu0
  %v248 = vadd.f32 0.0, %v247
  %v249 = vpop.f32.mrf.mxu0
  %250 = vmatprep.mubr.bf16.mxu0 0
  %251 = vmatmul.mubr.bf16.gmra.mxu0 %v112
  %v252 = vpop.f32.mrf.mxu0
  %v253 = vadd.f32 0.0, %v252
  %v254 = vpop.f32.mrf.mxu0
  %v255 = vpop.f32.mrf.mxu0
  %v256 = vadd.f32 0.0, %v255
  %v257 = vpop.f32.mrf.mxu0
  %258 = vmatprep.mubr.bf16.mxu0 0
  %259 = vmatmul.mubr.bf16.gmra.mxu0 %v113
  %v260 = vpop.f32.mrf.mxu0
  %v261 = vadd.f32 0.0, %v260
  %v262 = vpop.f32.mrf.mxu0
  %v263 = vpop.f32.mrf.mxu0
  %v264 = vadd.f32 0.0, %v263
  %v265 = vpop.f32.mrf.mxu0
  %266 = vdwg.mxu0
  %v267 = vpack.c.bf16 %v208, %v205
  %v268 = vpack.c.bf16 %v216, %v213
  %v269 = vpack.c.bf16 %v224, %v221
  %v270 = vpack.c.bf16 %v232, %v229
  %v271 = vpack.c.bf16 %v240, %v237
  %v272 = vpack.c.bf16 %v248, %v245
  %v273 = vpack.c.bf16 %v256, %v253
  %v274 = vpack.c.bf16 %v264, %v261
  %v275 = vld [vmem:[%s3] sm:$0x1]
  %v277 = vlaneseq
  %v278 = vshrl.u32 %v277, 7
  %v279 = vsub.s32 0, %v278
  %v280 = vrot.slane %v275, %v279
  %v298 = vunpack.c.l.b16 %v26
  %v299 = vunpack.c.l.b16 %v27
  %v300 = vunpack.c.l.b16 %v28
  %v301 = vunpack.c.l.b16 %v29
  %v302 = vunpack.c.l.b16 %v30
  %v303 = vunpack.c.l.b16 %v31
  %v304 = vunpack.c.l.b16 %v32
  %v305 = vunpack.c.l.b16 %v33
  %v306 = vunpack.c.l.b16 %v34
  %v307 = vunpack.c.l.b16 %v35
  %v308 = vunpack.c.l.b16 %v36
  %v309 = vunpack.c.l.b16 %v37
  %v310 = vunpack.c.l.b16 %v38
  %v311 = vunpack.c.l.b16 %v39
  %v312 = vunpack.c.l.b16 %v40
  %v313 = vunpack.c.l.b16 %v41
  %v314 = vpack.c.b16 %v299, %v298
  %v315 = vpack.c.b16 %v301, %v300
  %v316 = vpack.c.b16 %v303, %v302
  %v317 = vpack.c.b16 %v305, %v304
  %v318 = vpack.c.b16 %v307, %v306
  %v319 = vpack.c.b16 %v309, %v308
  %v320 = vpack.c.b16 %v311, %v310
  %v321 = vpack.c.b16 %v313, %v312
  %330 = vmatprep.subr.bf16.mxu0 0
  %331 = vmatpush1.bf16.msra.mxu0 %v274
  %332 = vmatprep.subr.bf16.mxu0 0
  %333 = vmatpush1.bf16.msra.mxu0 %v273
  %334 = vmatprep.subr.bf16.mxu0 0
  %335 = vmatpush1.bf16.msra.mxu0 %v272
  %336 = vmatprep.subr.bf16.mxu0 0
  %337 = vmatpush1.bf16.msra.mxu0 %v271
  %338 = vmatprep.subr.bf16.mxu0 0
  %339 = vmatpush1.bf16.msra.mxu0 %v270
  %340 = vmatprep.subr.bf16.mxu0 0
  %341 = vmatpush1.bf16.msra.mxu0 %v269
  %342 = vmatprep.subr.bf16.mxu0 0
  %343 = vmatpush1.bf16.msra.mxu0 %v268
  %344 = vmatprep.subr.bf16.mxu0 0
  %345 = vmatpush1.bf16.msra.mxu0 %v267
  %346 = vmatprep.subr.bf16.mxu0 0
  %347 = vmatpush2.bf16.msra.mxu0 0
  %348 = vmatprep.subr.bf16.mxu0 0
  %349 = vmatpush2.bf16.msra.mxu0 0
  %350 = vmatprep.subr.bf16.mxu0 0
  %351 = vmatpush2.bf16.msra.mxu0 0
  %352 = vmatprep.subr.bf16.mxu0 0
  %353 = vmatpush2.bf16.msra.mxu0 0
  %354 = vmatprep.subr.bf16.mxu0 0
  %355 = vmatpush2.bf16.msra.mxu0 0
  %356 = vmatprep.subr.bf16.mxu0 0
  %357 = vmatpush2.bf16.msra.mxu0 0
  %358 = vmatprep.subr.bf16.mxu0 0
  %359 = vmatpush2.bf16.msra.mxu0 0
  %360 = vmatprep.subr.bf16.mxu0 0
  %361 = vmatpush2.bf16.msra.mxu0 0
  %362 = vmatprep.mubr.bf16.mxu0 0
  %363 = vmatmul.mubr.bf16.gmra.mxu0 %v314
  %v364 = vpop.f32.mrf.mxu0
  %v365 = vadd.f32 %v280, %v364
  %v366 = vpop.f32.mrf.mxu0
  %v367 = vpop.f32.mrf.mxu0
  %v368 = vadd.f32 %v280, %v367
  %v369 = vpop.f32.mrf.mxu0
  %370 = vmatprep.mubr.bf16.mxu0 0
  %371 = vmatmul.mubr.bf16.gmra.mxu0 %v315
  %v372 = vpop.f32.mrf.mxu0
  %v373 = vadd.f32 %v280, %v372
  %v374 = vpop.f32.mrf.mxu0
  %v375 = vpop.f32.mrf.mxu0
  %v376 = vadd.f32 %v280, %v375
  %v377 = vpop.f32.mrf.mxu0
  %378 = vmatprep.mubr.bf16.mxu0 0
  %379 = vmatmul.mubr.bf16.gmra.mxu0 %v316
  %v380 = vpop.f32.mrf.mxu0
  %v381 = vadd.f32 %v280, %v380
  %v382 = vpop.f32.mrf.mxu0
  %v383 = vpop.f32.mrf.mxu0
  %v384 = vadd.f32 %v280, %v383
  %v385 = vpop.f32.mrf.mxu0
  %386 = vmatprep.mubr.bf16.mxu0 0
  %387 = vmatmul.mubr.bf16.gmra.mxu0 %v317
  %v388 = vpop.f32.mrf.mxu0
  %v389 = vadd.f32 %v280, %v388
  %v390 = vpop.f32.mrf.mxu0
  %v391 = vpop.f32.mrf.mxu0
  %v392 = vadd.f32 %v280, %v391
  %v393 = vpop.f32.mrf.mxu0
  %394 = vmatprep.mubr.bf16.mxu0 0
  %395 = vmatmul.mubr.bf16.gmra.mxu0 %v318
  %v396 = vpop.f32.mrf.mxu0
  %v397 = vadd.f32 %v280, %v396
  %v398 = vpop.f32.mrf.mxu0
  %v399 = vpop.f32.mrf.mxu0
  %v400 = vadd.f32 %v280, %v399
  %v401 = vpop.f32.mrf.mxu0
  %402 = vmatprep.mubr.bf16.mxu0 0
  %403 = vmatmul.mubr.bf16.gmra.mxu0 %v319
  %v404 = vpop.f32.mrf.mxu0
  %v405 = vadd.f32 %v280, %v404
  %v406 = vpop.f32.mrf.mxu0
  %v407 = vpop.f32.mrf.mxu0
  %v408 = vadd.f32 %v280, %v407
  %v409 = vpop.f32.mrf.mxu0
  %410 = vmatprep.mubr.bf16.mxu0 0
  %411 = vmatmul.mubr.bf16.gmra.mxu0 %v320
  %v412 = vpop.f32.mrf.mxu0
  %v413 = vadd.f32 %v280, %v412
  %v414 = vpop.f32.mrf.mxu0
  %v415 = vpop.f32.mrf.mxu0
  %v416 = vadd.f32 %v280, %v415
  %v417 = vpop.f32.mrf.mxu0
  %418 = vmatprep.mubr.bf16.mxu0 0
  %419 = vmatmul.mubr.bf16.gmra.mxu0 %v321
  %v420 = vpop.f32.mrf.mxu0
  %v421 = vadd.f32 %v280, %v420
  %v422 = vpop.f32.mrf.mxu0
  %v423 = vpop.f32.mrf.mxu0
  %v424 = vadd.f32 %v280, %v423
  %v425 = vpop.f32.mrf.mxu0
  %426 = vdwg.mxu0
  %v427 = vmax.f32 %v365, 0.0
  %v428 = vmax.f32 %v368, 0.0
  %v429 = vmax.f32 %v373, 0.0
  %v430 = vmax.f32 %v376, 0.0
  %v431 = vmax.f32 %v381, 0.0
  %v432 = vmax.f32 %v384, 0.0
  %v433 = vmax.f32 %v389, 0.0
  %v434 = vmax.f32 %v392, 0.0
  %v435 = vmax.f32 %v397, 0.0
  %v436 = vmax.f32 %v400, 0.0
  %v437 = vmax.f32 %v405, 0.0
  %v438 = vmax.f32 %v408, 0.0
  %v439 = vmax.f32 %v413, 0.0
  %v440 = vmax.f32 %v416, 0.0
  %v441 = vmax.f32 %v421, 0.0
  %v442 = vmax.f32 %v424, 0.0
  %443 = vst [vmem:[%s7] sm:$0xff] %v427
  %444 = vst [vmem:[%s7 + $0x8] sm:$0xff] %v428
  %445 = vst [vmem:[%s7 + $0x10] sm:$0xff] %v429
  %446 = vst [vmem:[%s7 + $0x18] sm:$0xff] %v430
  %447 = vst [vmem:[%s7 + $0x20] sm:$0xff] %v431
  %448 = vst [vmem:[%s7 + $0x28] sm:$0xff] %v432
  %449 = vst [vmem:[%s7 + $0x30] sm:$0xff] %v433
  %450 = vst [vmem:[%s7 + $0x38] sm:$0xff] %v434
  %451 = vst [vmem:[%s7 + $0x40] sm:$0xff] %v435
  %452 = vst [vmem:[%s7 + $0x48] sm:$0xff] %v436
  %453 = vst [vmem:[%s7 + $0x50] sm:$0xff] %v437
  %454 = vst [vmem:[%s7 + $0x58] sm:$0xff] %v438
  %455 = vst [vmem:[%s7 + $0x60] sm:$0xff] %v439
  %456 = vst [vmem:[%s7 + $0x68] sm:$0xff] %v440
  %457 = vst [vmem:[%s7 + $0x70] sm:$0xff] %v441
  %458 = vst [vmem:[%s7 + $0x78] sm:$0xff] %v442
  %v459 = vpack.c.bf16 %v428, %v427
  %v460 = vpack.c.bf16 %v430, %v429
  %v461 = vpack.c.bf16 %v432, %v431
  %v462 = vpack.c.bf16 %v434, %v433
  %v463 = vpack.c.bf16 %v436, %v435
  %v464 = vpack.c.bf16 %v438, %v437
  %v465 = vpack.c.bf16 %v440, %v439
  %v466 = vpack.c.bf16 %v442, %v441
  %v467 = vld [vmem:[%s4] sm:$0xf]
  %v468 = vld [vmem:[%s4 + $0x4] sm:$0xf]
  %v469 = vld [vmem:[%s4 + $0x8] sm:$0xf]
  %v470 = vld [vmem:[%s4 + $0xc] sm:$0xf]
  %v471 = vld [vmem:[%s4 + $0x10] sm:$0xf]
  %v472 = vld [vmem:[%s4 + $0x14] sm:$0xf]
  %v473 = vld [vmem:[%s4 + $0x18] sm:$0xf]
  %v474 = vld [vmem:[%s4 + $0x1c] sm:$0xf]
  %v475 = vld [vmem:[%s4 + $0x20] sm:$0xf]
  %v476 = vld [vmem:[%s4 + $0x24] sm:$0xf]
  %v477 = vld [vmem:[%s4 + $0x28] sm:$0xf]
  %v478 = vld [vmem:[%s4 + $0x2c] sm:$0xf]
  %v479 = vld [vmem:[%s4 + $0x30] sm:$0xf]
  %v480 = vld [vmem:[%s4 + $0x34] sm:$0xf]
  %v481 = vld [vmem:[%s4 + $0x38] sm:$0xf]
  %v482 = vld [vmem:[%s4 + $0x3c] sm:$0xf]
  %v499 = vunpack.c.l.b16 %v467
  %v500 = vunpack.c.l.b16 %v468
  %v501 = vunpack.c.l.b16 %v469
  %v502 = vunpack.c.l.b16 %v470
  %v503 = vunpack.c.l.b16 %v471
  %v504 = vunpack.c.l.b16 %v472
  %v505 = vunpack.c.l.b16 %v473
  %v506 = vunpack.c.l.b16 %v474
  %v507 = vunpack.c.l.b16 %v475
  %v508 = vunpack.c.l.b16 %v476
  %v509 = vunpack.c.l.b16 %v477
  %v510 = vunpack.c.l.b16 %v478
  %v511 = vunpack.c.l.b16 %v479
  %v512 = vunpack.c.l.b16 %v480
  %v513 = vunpack.c.l.b16 %v481
  %v514 = vunpack.c.l.b16 %v482
  %v515 = vpack.c.b16 %v500, %v499
  %v516 = vpack.c.b16 %v502, %v501
  %v517 = vpack.c.b16 %v504, %v503
  %v518 = vpack.c.b16 %v506, %v505
  %v519 = vpack.c.b16 %v508, %v507
  %v520 = vpack.c.b16 %v510, %v509
  %v521 = vpack.c.b16 %v512, %v511
  %v522 = vpack.c.b16 %v514, %v513
  %531 = vmatprep.subr.bf16.mxu0 0
  %532 = vmatpush1.bf16.msra.mxu0 %v522
  %533 = vmatprep.subr.bf16.mxu0 0
  %534 = vmatpush1.bf16.msra.mxu0 %v521
  %535 = vmatprep.subr.bf16.mxu0 0
  %536 = vmatpush1.bf16.msra.mxu0 %v520
  %537 = vmatprep.subr.bf16.mxu0 0
  %538 = vmatpush1.bf16.msra.mxu0 %v519
  %539 = vmatprep.subr.bf16.mxu0 0
  %540 = vmatpush1.bf16.msra.mxu0 %v518
  %541 = vmatprep.subr.bf16.mxu0 0
  %542 = vmatpush1.bf16.msra.mxu0 %v517
  %543 = vmatprep.subr.bf16.mxu0 0
  %544 = vmatpush1.bf16.msra.mxu0 %v516
  %545 = vmatprep.subr.bf16.mxu0 0
  %546 = vmatpush1.bf16.msra.mxu0 %v515
  %547 = vmatprep.subr.bf16.mxu0 0
  %548 = vmatpush2.bf16.msra.mxu0 0
  %549 = vmatprep.subr.bf16.mxu0 0
  %550 = vmatpush2.bf16.msra.mxu0 0
  %551 = vmatprep.subr.bf16.mxu0 0
  %552 = vmatpush2.bf16.msra.mxu0 0
  %553 = vmatprep.subr.bf16.mxu0 0
  %554 = vmatpush2.bf16.msra.mxu0 0
  %555 = vmatprep.subr.bf16.mxu0 0
  %556 = vmatpush2.bf16.msra.mxu0 0
  %557 = vmatprep.subr.bf16.mxu0 0
  %558 = vmatpush2.bf16.msra.mxu0 0
  %559 = vmatprep.subr.bf16.mxu0 0
  %560 = vmatpush2.bf16.msra.mxu0 0
  %561 = vmatprep.subr.bf16.mxu0 0
  %562 = vmatpush2.bf16.msra.mxu0 0
  %563 = vmatprep.mubr.bf16.mxu0 0
  %564 = vmatmul.mubr.bf16.gmra.mxu0 %v459
  %v565 = vpop.f32.mrf.mxu0
  %v566 = vadd.f32 0.0, %v565
  %v567 = vpop.f32.mrf.mxu0
  %v568 = vpop.f32.mrf.mxu0
  %v569 = vadd.f32 0.0, %v568
  %v570 = vpop.f32.mrf.mxu0
  %571 = vmatprep.mubr.bf16.mxu0 0
  %572 = vmatmul.mubr.bf16.gmra.mxu0 %v460
  %v573 = vpop.f32.mrf.mxu0
  %v574 = vadd.f32 0.0, %v573
  %v575 = vpop.f32.mrf.mxu0
  %v576 = vpop.f32.mrf.mxu0
  %v577 = vadd.f32 0.0, %v576
  %v578 = vpop.f32.mrf.mxu0
  %579 = vmatprep.mubr.bf16.mxu0 0
  %580 = vmatmul.mubr.bf16.gmra.mxu0 %v461
  %v581 = vpop.f32.mrf.mxu0
  %v582 = vadd.f32 0.0, %v581
  %v583 = vpop.f32.mrf.mxu0
  %v584 = vpop.f32.mrf.mxu0
  %v585 = vadd.f32 0.0, %v584
  %v586 = vpop.f32.mrf.mxu0
  %587 = vmatprep.mubr.bf16.mxu0 0
  %588 = vmatmul.mubr.bf16.gmra.mxu0 %v462
  %v589 = vpop.f32.mrf.mxu0
  %v590 = vadd.f32 0.0, %v589
  %v591 = vpop.f32.mrf.mxu0
  %v592 = vpop.f32.mrf.mxu0
  %v593 = vadd.f32 0.0, %v592
  %v594 = vpop.f32.mrf.mxu0
  %595 = vmatprep.mubr.bf16.mxu0 0
  %596 = vmatmul.mubr.bf16.gmra.mxu0 %v463
  %v597 = vpop.f32.mrf.mxu0
  %v598 = vadd.f32 0.0, %v597
  %v599 = vpop.f32.mrf.mxu0
  %v600 = vpop.f32.mrf.mxu0
  %v601 = vadd.f32 0.0, %v600
  %v602 = vpop.f32.mrf.mxu0
  %603 = vmatprep.mubr.bf16.mxu0 0
  %604 = vmatmul.mubr.bf16.gmra.mxu0 %v464
  %v605 = vpop.f32.mrf.mxu0
  %v606 = vadd.f32 0.0, %v605
  %v607 = vpop.f32.mrf.mxu0
  %v608 = vpop.f32.mrf.mxu0
  %v609 = vadd.f32 0.0, %v608
  %v610 = vpop.f32.mrf.mxu0
  %611 = vmatprep.mubr.bf16.mxu0 0
  %612 = vmatmul.mubr.bf16.gmra.mxu0 %v465
  %v613 = vpop.f32.mrf.mxu0
  %v614 = vadd.f32 0.0, %v613
  %v615 = vpop.f32.mrf.mxu0
  %v616 = vpop.f32.mrf.mxu0
  %v617 = vadd.f32 0.0, %v616
  %v618 = vpop.f32.mrf.mxu0
  %619 = vmatprep.mubr.bf16.mxu0 0
  %620 = vmatmul.mubr.bf16.gmra.mxu0 %v466
  %v621 = vpop.f32.mrf.mxu0
  %v622 = vadd.f32 0.0, %v621
  %v623 = vpop.f32.mrf.mxu0
  %v624 = vpop.f32.mrf.mxu0
  %v625 = vadd.f32 0.0, %v624
  %v626 = vpop.f32.mrf.mxu0
  %627 = vdwg.mxu0
  %v628 = vpack.c.bf16 %v569, %v566
  %v629 = vpack.c.bf16 %v577, %v574
  %v630 = vpack.c.bf16 %v585, %v582
  %v631 = vpack.c.bf16 %v593, %v590
  %v632 = vpack.c.bf16 %v601, %v598
  %v633 = vpack.c.bf16 %v609, %v606
  %v634 = vpack.c.bf16 %v617, %v614
  %v635 = vpack.c.bf16 %v625, %v622
  %v636 = vld [vmem:[%s5] sm:$0x1]
  %v638 = vlaneseq
  %v639 = vshrl.u32 %v638, 7
  %v640 = vsub.s32 0, %v639
  %v641 = vrot.slane %v636, %v640
  %643 = vmatprep.subr.bf16.mxu0 0
  %644 = vmatpush1.bf16.msra.mxu0 %v635
  %645 = vmatprep.subr.bf16.mxu0 0
  %646 = vmatpush1.bf16.msra.mxu0 %v634
  %647 = vmatprep.subr.bf16.mxu0 0
  %648 = vmatpush1.bf16.msra.mxu0 %v633
  %649 = vmatprep.subr.bf16.mxu0 0
  %650 = vmatpush1.bf16.msra.mxu0 %v632
  %651 = vmatprep.subr.bf16.mxu0 0
  %652 = vmatpush1.bf16.msra.mxu0 %v631
  %653 = vmatprep.subr.bf16.mxu0 0
  %654 = vmatpush1.bf16.msra.mxu0 %v630
  %655 = vmatprep.subr.bf16.mxu0 0
  %656 = vmatpush1.bf16.msra.mxu0 %v629
  %657 = vmatprep.subr.bf16.mxu0 0
  %658 = vmatpush1.bf16.msra.mxu0 %v628
  %659 = vmatprep.subr.bf16.mxu0 0
  %660 = vmatpush2.bf16.msra.mxu0 0
  %661 = vmatprep.subr.bf16.mxu0 0
  %662 = vmatpush2.bf16.msra.mxu0 0
  %663 = vmatprep.subr.bf16.mxu0 0
  %664 = vmatpush2.bf16.msra.mxu0 0
  %665 = vmatprep.subr.bf16.mxu0 0
  %666 = vmatpush2.bf16.msra.mxu0 0
  %667 = vmatprep.subr.bf16.mxu0 0
  %668 = vmatpush2.bf16.msra.mxu0 0
  %669 = vmatprep.subr.bf16.mxu0 0
  %670 = vmatpush2.bf16.msra.mxu0 0
  %671 = vmatprep.subr.bf16.mxu0 0
  %672 = vmatpush2.bf16.msra.mxu0 0
  %673 = vmatprep.subr.bf16.mxu0 0
  %674 = vmatpush2.bf16.msra.mxu0 0
  %675 = vmatprep.mubr.bf16.mxu0 0
  %676 = vmatmul.mubr.bf16.gmra.mxu0 %v314
  %v677 = vpop.f32.mrf.mxu0
  %v678 = vadd.f32 %v641, %v677
  %v679 = vpop.f32.mrf.mxu0
  %v680 = vpop.f32.mrf.mxu0
  %v681 = vadd.f32 %v641, %v680
  %v682 = vpop.f32.mrf.mxu0
  %683 = vmatprep.mubr.bf16.mxu0 0
  %684 = vmatmul.mubr.bf16.gmra.mxu0 %v315
  %v685 = vpop.f32.mrf.mxu0
  %v686 = vadd.f32 %v641, %v685
  %v687 = vpop.f32.mrf.mxu0
  %v688 = vpop.f32.mrf.mxu0
  %v689 = vadd.f32 %v641, %v688
  %v690 = vpop.f32.mrf.mxu0
  %691 = vmatprep.mubr.bf16.mxu0 0
  %692 = vmatmul.mubr.bf16.gmra.mxu0 %v316
  %v693 = vpop.f32.mrf.mxu0
  %v694 = vadd.f32 %v641, %v693
  %v695 = vpop.f32.mrf.mxu0
  %v696 = vpop.f32.mrf.mxu0
  %v697 = vadd.f32 %v641, %v696
  %v698 = vpop.f32.mrf.mxu0
  %699 = vmatprep.mubr.bf16.mxu0 0
  %700 = vmatmul.mubr.bf16.gmra.mxu0 %v317
  %v701 = vpop.f32.mrf.mxu0
  %v702 = vadd.f32 %v641, %v701
  %v703 = vpop.f32.mrf.mxu0
  %v704 = vpop.f32.mrf.mxu0
  %v705 = vadd.f32 %v641, %v704
  %v706 = vpop.f32.mrf.mxu0
  %707 = vmatprep.mubr.bf16.mxu0 0
  %708 = vmatmul.mubr.bf16.gmra.mxu0 %v318
  %v709 = vpop.f32.mrf.mxu0
  %v710 = vadd.f32 %v641, %v709
  %v711 = vpop.f32.mrf.mxu0
  %v712 = vpop.f32.mrf.mxu0
  %v713 = vadd.f32 %v641, %v712
  %v714 = vpop.f32.mrf.mxu0
  %715 = vmatprep.mubr.bf16.mxu0 0
  %716 = vmatmul.mubr.bf16.gmra.mxu0 %v319
  %v717 = vpop.f32.mrf.mxu0
  %v718 = vadd.f32 %v641, %v717
  %v719 = vpop.f32.mrf.mxu0
  %v720 = vpop.f32.mrf.mxu0
  %v721 = vadd.f32 %v641, %v720
  %v722 = vpop.f32.mrf.mxu0
  %723 = vmatprep.mubr.bf16.mxu0 0
  %724 = vmatmul.mubr.bf16.gmra.mxu0 %v320
  %v725 = vpop.f32.mrf.mxu0
  %v726 = vadd.f32 %v641, %v725
  %v727 = vpop.f32.mrf.mxu0
  %v728 = vpop.f32.mrf.mxu0
  %v729 = vadd.f32 %v641, %v728
  %v730 = vpop.f32.mrf.mxu0
  %731 = vmatprep.mubr.bf16.mxu0 0
  %732 = vmatmul.mubr.bf16.gmra.mxu0 %v321
  %v733 = vpop.f32.mrf.mxu0
  %v734 = vadd.f32 %v641, %v733
  %v735 = vpop.f32.mrf.mxu0
  %v736 = vpop.f32.mrf.mxu0
  %v737 = vadd.f32 %v641, %v736
  %v738 = vpop.f32.mrf.mxu0
  %739 = vdwg.mxu0
  %v740 = vlaneseq
  %v741 = vand.u32 %v740, 127
  %vm742 = vcmp.lt.s32.totalorder %v741, 4
  %v743 = vsel %vm742, %v678, -1e+30
  %v744 = vsel %vm742, %v681, -1e+30
  %v745 = vsel %vm742, %v686, -1e+30
  %v746 = vsel %vm742, %v689, -1e+30
  %v747 = vsel %vm742, %v694, -1e+30
  %v748 = vsel %vm742, %v697, -1e+30
  %v749 = vsel %vm742, %v702, -1e+30
  %v750 = vsel %vm742, %v705, -1e+30
  %v751 = vsel %vm742, %v710, -1e+30
  %v752 = vsel %vm742, %v713, -1e+30
  %v753 = vsel %vm742, %v718, -1e+30
  %v754 = vsel %vm742, %v721, -1e+30
  %v755 = vsel %vm742, %v726, -1e+30
  %v756 = vsel %vm742, %v729, -1e+30
  %v757 = vsel %vm742, %v734, -1e+30
  %v758 = vsel %vm742, %v737, -1e+30
  %759 = vmax.xlane.f32.xlu0 %v743
  %v760 = vpop.xlane.xlu0 %759
  %761 = vmax.xlane.f32.xlu0 %v744
  %v762 = vpop.xlane.xlu0 %761
  %763 = vmax.xlane.f32.xlu0 %v745
  %v764 = vpop.xlane.xlu0 %763
  %765 = vmax.xlane.f32.xlu0 %v746
  %v766 = vpop.xlane.xlu0 %765
  %767 = vmax.xlane.f32.xlu0 %v747
  %v768 = vpop.xlane.xlu0 %767
  %769 = vmax.xlane.f32.xlu0 %v748
  %v770 = vpop.xlane.xlu0 %769
  %771 = vmax.xlane.f32.xlu0 %v749
  %v772 = vpop.xlane.xlu0 %771
  %773 = vmax.xlane.f32.xlu0 %v750
  %v774 = vpop.xlane.xlu0 %773
  %775 = vmax.xlane.f32.xlu0 %v751
  %v776 = vpop.xlane.xlu0 %775
  %777 = vmax.xlane.f32.xlu0 %v752
  %v778 = vpop.xlane.xlu0 %777
  %779 = vmax.xlane.f32.xlu0 %v753
  %v780 = vpop.xlane.xlu0 %779
  %781 = vmax.xlane.f32.xlu0 %v754
  %v782 = vpop.xlane.xlu0 %781
  %783 = vmax.xlane.f32.xlu0 %v755
  %v784 = vpop.xlane.xlu0 %783
  %785 = vmax.xlane.f32.xlu0 %v756
  %v786 = vpop.xlane.xlu0 %785
  %787 = vmax.xlane.f32.xlu0 %v757
  %v788 = vpop.xlane.xlu0 %787
  %789 = vmax.xlane.f32.xlu0 %v758
  %v790 = vpop.xlane.xlu0 %789
  %v791 = vsub.f32 %v743, %v760
  %v792 = vsub.f32 %v744, %v762
  %v793 = vsub.f32 %v745, %v764
  %v794 = vsub.f32 %v746, %v766
  %v795 = vsub.f32 %v747, %v768
  %v796 = vsub.f32 %v748, %v770
  %v797 = vsub.f32 %v749, %v772
  %v798 = vsub.f32 %v750, %v774
  %v799 = vsub.f32 %v751, %v776
  %v800 = vsub.f32 %v752, %v778
  %v801 = vsub.f32 %v753, %v780
  %v802 = vsub.f32 %v754, %v782
  %v803 = vsub.f32 %v755, %v784
  %v804 = vsub.f32 %v756, %v786
  %v805 = vsub.f32 %v757, %v788
  %v806 = vsub.f32 %v758, %v790
  %v807 = vmul.f32 %v791, 1.442695
  %v808 = vpow.pop %v807
  %v809 = vmul.f32 %v792, 1.442695
  %v810 = vpow.pop %v809
  %v811 = vmul.f32 %v793, 1.442695
  %v812 = vpow.pop %v811
  %v813 = vmul.f32 %v794, 1.442695
  %v814 = vpow.pop %v813
  %v815 = vmul.f32 %v795, 1.442695
  %v816 = vpow.pop %v815
  %v817 = vmul.f32 %v796, 1.442695
  %v818 = vpow.pop %v817
  %v819 = vmul.f32 %v797, 1.442695
  %v820 = vpow.pop %v819
  %v821 = vmul.f32 %v798, 1.442695
  %v822 = vpow.pop %v821
  %v823 = vmul.f32 %v799, 1.442695
  %v824 = vpow.pop %v823
  %v825 = vmul.f32 %v800, 1.442695
  %v826 = vpow.pop %v825
  %v827 = vmul.f32 %v801, 1.442695
  %v828 = vpow.pop %v827
  %v829 = vmul.f32 %v802, 1.442695
  %v830 = vpow.pop %v829
  %v831 = vmul.f32 %v803, 1.442695
  %v832 = vpow.pop %v831
  %v833 = vmul.f32 %v804, 1.442695
  %v834 = vpow.pop %v833
  %v835 = vmul.f32 %v805, 1.442695
  %v836 = vpow.pop %v835
  %v837 = vmul.f32 %v806, 1.442695
  %v838 = vpow.pop %v837
  %839 = vadd.xlane.f32.xlu0 %v808
  %v840 = vpop.xlane.xlu0 %839
  %841 = vadd.xlane.f32.xlu0 %v810
  %v842 = vpop.xlane.xlu0 %841
  %843 = vadd.xlane.f32.xlu0 %v812
  %v844 = vpop.xlane.xlu0 %843
  %845 = vadd.xlane.f32.xlu0 %v814
  %v846 = vpop.xlane.xlu0 %845
  %847 = vadd.xlane.f32.xlu0 %v816
  %v848 = vpop.xlane.xlu0 %847
  %849 = vadd.xlane.f32.xlu0 %v818
  %v850 = vpop.xlane.xlu0 %849
  %851 = vadd.xlane.f32.xlu0 %v820
  %v852 = vpop.xlane.xlu0 %851
  %853 = vadd.xlane.f32.xlu0 %v822
  %v854 = vpop.xlane.xlu0 %853
  %855 = vadd.xlane.f32.xlu0 %v824
  %v856 = vpop.xlane.xlu0 %855
  %857 = vadd.xlane.f32.xlu0 %v826
  %v858 = vpop.xlane.xlu0 %857
  %859 = vadd.xlane.f32.xlu0 %v828
  %v860 = vpop.xlane.xlu0 %859
  %861 = vadd.xlane.f32.xlu0 %v830
  %v862 = vpop.xlane.xlu0 %861
  %863 = vadd.xlane.f32.xlu0 %v832
  %v864 = vpop.xlane.xlu0 %863
  %865 = vadd.xlane.f32.xlu0 %v834
  %v866 = vpop.xlane.xlu0 %865
  %867 = vadd.xlane.f32.xlu0 %v836
  %v868 = vpop.xlane.xlu0 %867
  %869 = vadd.xlane.f32.xlu0 %v838
  %v870 = vpop.xlane.xlu0 %869
  %v871 = vlog2.pop %v840
  %v872 = vmul.f32 %v871, 0.6931472
  %v873 = vlog2.pop %v842
  %v874 = vmul.f32 %v873, 0.6931472
  %v875 = vlog2.pop %v844
  %v876 = vmul.f32 %v875, 0.6931472
  %v877 = vlog2.pop %v846
  %v878 = vmul.f32 %v877, 0.6931472
  %v879 = vlog2.pop %v848
  %v880 = vmul.f32 %v879, 0.6931472
  %v881 = vlog2.pop %v850
  %v882 = vmul.f32 %v881, 0.6931472
  %v883 = vlog2.pop %v852
  %v884 = vmul.f32 %v883, 0.6931472
  %v885 = vlog2.pop %v854
  %v886 = vmul.f32 %v885, 0.6931472
  %v887 = vlog2.pop %v856
  %v888 = vmul.f32 %v887, 0.6931472
  %v889 = vlog2.pop %v858
  %v890 = vmul.f32 %v889, 0.6931472
  %v891 = vlog2.pop %v860
  %v892 = vmul.f32 %v891, 0.6931472
  %v893 = vlog2.pop %v862
  %v894 = vmul.f32 %v893, 0.6931472
  %v895 = vlog2.pop %v864
  %v896 = vmul.f32 %v895, 0.6931472
  %v897 = vlog2.pop %v866
  %v898 = vmul.f32 %v897, 0.6931472
  %v899 = vlog2.pop %v868
  %v900 = vmul.f32 %v899, 0.6931472
  %v901 = vlog2.pop %v870
  %v902 = vmul.f32 %v901, 0.6931472
  %v903 = vsub.f32 %v791, %v872
  %v904 = vsub.f32 %v792, %v874
  %v905 = vsub.f32 %v793, %v876
  %v906 = vsub.f32 %v794, %v878
  %v907 = vsub.f32 %v795, %v880
  %v908 = vsub.f32 %v796, %v882
  %v909 = vsub.f32 %v797, %v884
  %v910 = vsub.f32 %v798, %v886
  %v911 = vsub.f32 %v799, %v888
  %v912 = vsub.f32 %v800, %v890
  %v913 = vsub.f32 %v801, %v892
  %v914 = vsub.f32 %v802, %v894
  %v915 = vsub.f32 %v803, %v896
  %v916 = vsub.f32 %v804, %v898
  %v917 = vsub.f32 %v805, %v900
  %v918 = vsub.f32 %v806, %v902
  %919 = vst [vmem:[%s6] sm:$0xff] %v903
  %920 = vst [vmem:[%s6 + $0x8] sm:$0xff] %v904
  %921 = vst [vmem:[%s6 + $0x10] sm:$0xff] %v905
  %922 = vst [vmem:[%s6 + $0x18] sm:$0xff] %v906
  %923 = vst [vmem:[%s6 + $0x20] sm:$0xff] %v907
  %924 = vst [vmem:[%s6 + $0x28] sm:$0xff] %v908
  %925 = vst [vmem:[%s6 + $0x30] sm:$0xff] %v909
  %926 = vst [vmem:[%s6 + $0x38] sm:$0xff] %v910
  %927 = vst [vmem:[%s6 + $0x40] sm:$0xff] %v911
  %928 = vst [vmem:[%s6 + $0x48] sm:$0xff] %v912
  %929 = vst [vmem:[%s6 + $0x50] sm:$0xff] %v913
  %930 = vst [vmem:[%s6 + $0x58] sm:$0xff] %v914
  %931 = vst [vmem:[%s6 + $0x60] sm:$0xff] %v915
  %932 = vst [vmem:[%s6 + $0x68] sm:$0xff] %v916
  %933 = vst [vmem:[%s6 + $0x70] sm:$0xff] %v917
  %934 = vst [vmem:[%s6 + $0x78] sm:$0xff] %v918
  // Predicated region
  $region26: #{gcn_forward.1} parent=0 // pred_check
    _
  $region27: #{gcn_forward.1} parent=0 // pred_check_branch
    %936 = sbr.rel (0) target = $region29
  $region28: #{gcn_forward.1} parent=0 // pred_region
    _
  $region29: #{gcn_forward.1} parent=0 // pred_fallthru
    _
  // Predicated region
  $region30: #{gcn_forward.1} parent=0 // pred_check
    _
  $region31: #{gcn_forward.1} parent=0 // pred_check_branch
    %938 = sbr.rel (0) target = $region33
  $region32: #{gcn_forward.1} parent=0 // pred_region
    _
  $region33: #{gcn_forward.1} parent=0 // pred_fallthru
    _
  // Predicated region
  $region34: #{gcn_forward.1} parent=0 // pred_check
    _
  $region35: #{gcn_forward.1} parent=0 // pred_check_branch
    %940 = sbr.rel (0) target = $region37
  $region36: #{gcn_forward.1} parent=0 // pred_region
    _
  $region37: #{gcn_forward.1} parent=0 // pred_fallthru
    _
  // Predicated region
  $region38: #{gcn_forward.1} parent=0 // pred_check
    _
  $region39: #{gcn_forward.1} parent=0 // pred_check_branch
    %942 = sbr.rel (0) target = $region41
  $region40: #{gcn_forward.1} parent=0 // pred_region
    _
  $region41: #{gcn_forward.1} parent=0 // pred_fallthru
    _

</llo_original>
